<compile_context>
chip_gen: v5e
topology: v5e:2x2
jax: 0.10.0
libtpu: 0.0.40
codegen_flags: <defaults>
</compile_context>

<pallas_src>
import jax
import jax.numpy as jnp
from jax.experimental import pallas as pl
from jax.experimental.pallas import tpu as pltpu


def _packed_kernel(x_ref, w_ref, o_ref):
    # x_ref: (tm, 128) native dtype (P original rows packed per packed row)
    # w_ref: (1, 128) f32 (weights tiled P times)
    # o_ref: (tm, P)
    tm, lanes = x_ref.shape
    p = o_ref.shape[-1]
    d = lanes // p
    prod = x_ref[...] * w_ref[...]                       # promotes to f32
    # Segmented 32-lane reduce: out[r, s] = sum_d prod[r, s*D + d]
    o_ref[...] = prod.reshape(tm, p, d).sum(axis=-1).astype(o_ref.dtype)


def _column_kernel(x_ref, w_ref, o_ref):
    # Fallback: x_ref (tm, D), w_ref (1, D) f32, o_ref (tm, 1). No transpose.
    prod = x_ref[...] * w_ref[...]                       # promotes to f32
    o_ref[...] = jnp.sum(prod, axis=-1, keepdims=True).astype(o_ref.dtype)


def _round_up(n, m):
    return ((n + m - 1) // m) * m


def _choose_rows(nrows, row_bytes, target_bytes=4 << 20, min_rows=1024):
    """Rows per grid step: ~4 MiB per step, >= ~8 steps when nrows is large.

    Returned value is either == nrows (single full-extent block, always a
    legal block shape) or a multiple of 8 (satisfies the (8,128) rule for the
    x block sublane dim and the output block)."""
    target = max(8, (target_bytes // max(row_bytes, 1)) // 8 * 8)
    if nrows <= target:
        return nrows
    tm = target
    while tm > min_rows and pl.cdiv(nrows, tm) < 8:
        tm //= 2
    return max(8, (tm // 8) * 8)


def linear_combination(x, weights, *, tile_rows=None):
    """Pallas equivalent of PyTorch (x * weights).sum(dim=-1).

    `tile_rows`, if given, is rows-per-grid-step in *packed* rows for the
    packed path, or original rows for the fallback path (testing knob)."""
    D = x.shape[-1]
    lead_shape = x.shape[:-1]
    x2d = x.reshape(-1, D)
    M = x2d.shape[0]
    itemsize = x2d.dtype.itemsize

    # Output dtype follows input/weight promotion; accumulation is always f32.
    out_dtype = jnp.result_type(x.dtype, weights.dtype)
    w_f32 = weights.astype(jnp.float32).reshape(1, D)

    flops = 2 * M * D
    bytes_accessed = (x2d.size * itemsize + D * 4
                      + M * jnp.dtype(out_dtype).itemsize)
    cost = pl.CostEstimate(flops=flops, transcendentals=0,
                           bytes_accessed=bytes_accessed)
    cparams = pltpu.CompilerParams(dimension_semantics=("parallel",))

    pack_factor = 128 // D if (0 < D < 128 and 128 % D == 0) else 1
    use_packed = pack_factor > 1 and M > 0 and M % pack_factor == 0

    if use_packed:
        P = pack_factor
        Mp = M // P
        xp = x2d.reshape(Mp, 128)            # free relabel: contiguous row-major
        wp = jnp.tile(w_f32, (1, P))         # (1, 128), resident in VMEM
        tm = tile_rows if tile_rows is not None else _choose_rows(Mp, 128 * itemsize)
        nt = pl.cdiv(Mp, tm)                 # partial trailing block OK (no pad copy)
        out = pl.pallas_call(
            _packed_kernel,
            out_shape=jax.ShapeDtypeStruct((nt * tm, P), out_dtype),
            grid_spec=pltpu.PrefetchScalarGridSpec(
                num_scalar_prefetch=0,
                grid=(nt,),
                in_specs=[
                    pl.BlockSpec((tm, 128), lambda i: (i, 0)),  # streamed x tile
                    pl.BlockSpec((1, 128), lambda i: (0, 0)),   # weights, never re-fetched
                ],
                out_specs=pl.BlockSpec((tm, P), lambda i: (i, 0)),
            ),
            compiler_params=cparams,
            cost_estimate=cost,
        )(xp, wp)
        # Packed row r, segment p  <->  original row r*P + p.
        return out.reshape(-1)[:M].reshape(lead_shape)

    # ---- Fallback path (D doesn't pack into 128 lanes, or M % P != 0) ----
    # TODO(synk): could pad M to a multiple of P to keep the packed path, but
    # that costs an extra HBM pass over x; the column path is used instead.
    row_bytes = _round_up(max(D, 1), 128) * itemsize     # VMEM lane-padded row
    tm = tile_rows if tile_rows is not None else _choose_rows(M, row_bytes)
    nt = pl.cdiv(M, tm)
    out = pl.pallas_call(
        _column_kernel,
        out_shape=jax.ShapeDtypeStruct((nt * tm, 1), out_dtype),
        grid_spec=pltpu.PrefetchScalarGridSpec(
            num_scalar_prefetch=0,
            grid=(nt,),
            in_specs=[
                pl.BlockSpec((tm, D), lambda i: (i, 0)),
                pl.BlockSpec((1, D), lambda i: (0, 0)),
            ],
            out_specs=pl.BlockSpec((tm, 1), lambda i: (i, 0)),
        ),
        compiler_params=cparams,
        cost_estimate=cost,
    )(x2d, w_f32)
    return out[:M, 0].reshape(lead_shape)


if __name__ == "__main__":
    # LinearCombination(input_dim=32)
    input_dim = 32
    key = jax.random.PRNGKey(0)
    k0, k1, k2, k3 = jax.random.split(key, 4)

    # Primary check: matches torch init (weights = ones(input_dim)); packed path.
    x = jax.random.normal(k0, (2, 8, input_dim), dtype=jnp.float32)
    weights = jnp.ones((input_dim,), dtype=jnp.float32)
    out = jax.block_until_ready(linear_combination(x, weights))
    ref = jnp.sum(x * weights, axis=-1)
    assert out.shape == ref.shape == (2, 8)
    assert jnp.allclose(out, ref, atol=1e-5, rtol=1e-5)

    # Packed path, multi-tile grid with a partial trailing x block (no pad copy)
    # and non-trivial weights.
    x2 = jax.random.normal(k1, (3, 100, input_dim), dtype=jnp.float32)
    w2 = jax.random.normal(k2, (input_dim,), dtype=jnp.float32)
    out2 = jax.block_until_ready(linear_combination(x2, w2, tile_rows=32))
    ref2 = jnp.sum(x2 * w2, axis=-1)
    assert out2.shape == ref2.shape == (3, 100)
    assert jnp.allclose(out2, ref2, atol=1e-4, rtol=1e-4)

    # Column fallback path (M = 15 is not a multiple of the pack factor 4).
    x3 = jax.random.normal(k3, (5, 3, input_dim), dtype=jnp.float32)
    out3 = jax.block_until_ready(linear_combination(x3, w2))
    ref3 = jnp.sum(x3 * w2, axis=-1)
    assert out3.shape == ref3.shape == (5, 3)
    assert jnp.allclose(out3, ref3, atol=1e-4, rtol=1e-4)

    print("KERNEL_OK")
</pallas_src>

<mosaic_0001>
module attributes {stable_mosaic.version = 11 : i64} {
  func.func @_packed_kernel(%arg0: i32, %arg1: memref<4x128xf32, #tpu.memory_space<vmem>>, %arg2: memref<1x128xf32, #tpu.memory_space<vmem>>, %arg3: memref<4x4xf32, #tpu.memory_space<vmem>>) attributes {dimension_semantics = [#tpu.dimension_semantics<parallel>], iteration_bounds = array<i64: 1>, scalar_prefetch = 0 : i64, scratch_operands = 0 : i64, tpu.core_type = #tpu.core_type<tc>, window_params = [{transform_indices = @transform_0, window_bounds = array<i64: 4, 128>}, {pipeline_mode = #tpu.pipeline_mode<synchronous>, transform_indices = @transform_1, window_bounds = array<i64: 1, 128>}, {transform_indices = @transform_2, window_bounds = array<i64: 4, 4>}]} {
    %c0 = arith.constant 0 : index
    %c0_0 = arith.constant 0 : index
    %0 = vector.load %arg1[%c0, %c0_0] : memref<4x128xf32, #tpu.memory_space<vmem>>, vector<4x128xf32>
    %c0_1 = arith.constant 0 : index
    %c0_2 = arith.constant 0 : index
    %1 = vector.load %arg2[%c0_1, %c0_2] : memref<1x128xf32, #tpu.memory_space<vmem>>, vector<1x128xf32>
    %2 = vector.broadcast %1 : vector<1x128xf32> to vector<4x128xf32>
    %3 = arith.mulf %0, %2 : vector<4x128xf32>
    %4 = vector.shape_cast %3 : vector<4x128xf32> to vector<4x4x32xf32>
    %cst = arith.constant dense<0.000000e+00> : vector<4x4xf32>
    %5 = vector.multi_reduction <add>, %4, %cst [2] : vector<4x4x32xf32> to vector<4x4xf32>
    %c0_3 = arith.constant 0 : index
    %c0_4 = arith.constant 0 : index
    %6 = vector.load %arg3[%c0_3, %c0_4] : memref<4x4xf32, #tpu.memory_space<vmem>>, vector<4x4xf32>
    tpu.vector_store %arg3[%c0_3, %c0_4], %5 {strides = array<i32>} : memref<4x4xf32, #tpu.memory_space<vmem>>, vector<4x4xf32>,
    return
  }
  func.func @transform_0(%arg0: i32) -> (i32, i32) {
    %c0_i32 = arith.constant 0 : i32
    %c0_i32_0 = arith.constant 0 : i32
    return %arg0, %c0_i32 : i32, i32
  }
  func.func @transform_1(%arg0: i32) -> (i32, i32) {
    %c0_i32 = arith.constant 0 : i32
    %c0_i32_0 = arith.constant 0 : i32
    %c0_i32_1 = arith.constant 0 : i32
    return %c0_i32, %c0_i32_0 : i32, i32
  }
  func.func @transform_2(%arg0: i32) -> (i32, i32) {
    %c0_i32 = arith.constant 0 : i32
    %c0_i32_0 = arith.constant 0 : i32
    return %arg0, %c0_i32 : i32, i32
  }
}

</mosaic_0001>

<llo_original>
// kernel: tpu_custom_call.1
$region0: #{tpu_custom_call.1}
  #allocation0 [shape = 'u32[]', space=smem, size = 0x4, offset = 0x4, fixed_abs, tag = 'smem constant byte address 0x4 - core index']
  #allocation1 [shape = 'u32[72,128]{1,0:T(1,128)}', space=vmem, size = 0x9000, scoped, tag = 'internal scratch']
  %s0 = inlined_call_operand.hbm [shape: f32[4,128], index: 0, kind: input, shape index: {}]
  %s1 = inlined_call_operand.hbm [shape: f32[1,128], index: 1, kind: input, shape index: {}]
  %s2 = inlined_call_operand.hbm [shape: f32[4,4], index: 2, kind: output, shape index: {}]
  %s3 = sld [smem:[#allocation0]]
  $region26: #{tpu_custom_call.1} parent=0
    _
  %s5 = ssub.s32 1, %s3
  %s6 = scalar_select 0, %s5, %s3
  $region1: #{tpu_custom_call.1} parent=0
    #allocation2 [shape = 'u8[2048]{0}', space=vmem, size = 0x800, scoped, tag = 'input window, operand 0, single buffered']
    #allocation3 [shape = 's32[1]{0}', space=sflag, size = 0x4, scoped, tag = 'scoped memory for tpu_custom_call.1']
    #allocation4 [shape = 's32[1]{0}', space=sflag, size = 0x4, scoped, tag = 'scoped memory for tpu_custom_call.1']
    #allocation5 [shape = 'u8[512]{0}', space=vmem, size = 0x400, scoped, tag = 'input window, operand 1, single buffered']
    #allocation6 [shape = 's32[1]{0}', space=sflag, size = 0x4, scoped, tag = 'scoped memory for tpu_custom_call.1']
    #allocation7 [shape = 'u8[2048]{0}', space=vmem, size = 0x800, scoped, tag = 'output window, operand 0, single buffered']
    %7 = vsyncpa [#allocation3], 0
    %8 = vsyncpa [#allocation6], 0
    %9 = vsyncpa [#allocation4], 0
    // Predicated region
    $region2: #{tpu_custom_call.1} parent=1 // pred_check
      _
    $region3: #{tpu_custom_call.1} parent=1 // pred_check_branch
      %11 = sbr.rel (0) target = $region5
    $region4: #{tpu_custom_call.1} parent=1 // pred_region
      %13 = vsyncadd [#allocation3], 0
      %s15 = sshll.u32 %s0, 4
      %s16 = int_to_ptr.hbm [resolvable:$true] %s15
      %s17 = sshll.u32 [#allocation2], 4
      %s18 = int_to_ptr.vmem [resolvable:$true] %s17
      %20 = dma.hbm_to_vmem [thread:$0]  %s16, 64, %s18, [#allocation3]
    $region5: #{tpu_custom_call.1} parent=1 // pred_fallthru
      _
    // Predicated region
    $region6: #{tpu_custom_call.1} parent=1 // pred_check
      _
    $region7: #{tpu_custom_call.1} parent=1 // pred_check_branch
      %22 = sbr.rel (0) target = $region9
    $region8: #{tpu_custom_call.1} parent=1 // pred_region
      %24 = vsyncadd [#allocation6], 0
      %s26 = sshll.u32 %s1, 4
      %s27 = int_to_ptr.hbm [resolvable:$true] %s26
      %s28 = sshll.u32 [#allocation5], 4
      %s29 = int_to_ptr.vmem [resolvable:$true] %s28
      %31 = dma.hbm_to_vmem [thread:$0]  %s27, 16, %s29, [#allocation6]
    $region9: #{tpu_custom_call.1} parent=1 // pred_fallthru
      _
    // Predicated region
    $region10: #{tpu_custom_call.1} parent=1 // pred_check
      _
    $region11: #{tpu_custom_call.1} parent=1 // pred_check_branch
      %33 = sbr.rel (0) target = $region13
    $region12: #{tpu_custom_call.1} parent=1 // pred_region
      %35 = dma.done [#allocation3], 64
    $region13: #{tpu_custom_call.1} parent=1 // pred_fallthru
      _
    // Predicated region
    $region14: #{tpu_custom_call.1} parent=1 // pred_check
      _
    $region15: #{tpu_custom_call.1} parent=1 // pred_check_branch
      %37 = sbr.rel (0) target = $region17
    $region16: #{tpu_custom_call.1} parent=1 // pred_region
      %39 = dma.done [#allocation6], 16
    $region17: #{tpu_custom_call.1} parent=1 // pred_fallthru
      _
    %v40 = vld [vmem:[#allocation2] sm:$0xf]
    %v41 = vld [vmem:[#allocation5] sm:$0x1]
    %v43 = vperm.slane %v41, 0
    %v45 = vmul.f32 %v40, %v43
    %47 = vrot.lane.b32.xlu0 %v45, 96
    %v48 = vpop.permute.xlu0 %47
    %50 = vrot.lane.b32.xlu0 %v45, 64
    %v51 = vpop.permute.xlu0 %50
    %53 = vrot.lane.b32.xlu0 %v45, 32
    %v54 = vpop.permute.xlu0 %53
    %v56 = vrot.slane %v51, 4
    %vm57 = vcmask 1047556
    %v58 = vsel %vm57, %v56, %v45
    %v60 = vunpack.c.l.s4 1983009808
    %v61 = vunpack.c.0.s8 %v60
    %v62 = vperm.slane %v58, %v61
    %v63 = vrot.slane %v54, 4
    %v64 = vsel %vm57, %v63, %v48
    %v66 = vunpack.c.l.s4 1983009808
    %v67 = vunpack.c.0.s8 %v66
    %v68 = vperm.slane %v64, %v67
    %v69 = vrot.slane %v68, 4
    %v70 = vsel %vm57, %v69, %v62
    %v71 = vrot.slane %v62, 4
    %v72 = vsel %vm57, %v68, %v71
    %v74 = vunpack.c.l.s4 1934713408
    %v75 = vunpack.c.0.s8 %v74
    %v76 = vperm.slane %v70, %v75
    %v78 = vunpack.c.l.s4 1934713408
    %v79 = vunpack.c.0.s8 %v78
    %v80 = vperm.slane %v72, %v79
    %v81 = vrot.slane %v76, 4
    %v82 = vsel %vm57, 0.0, %v81
    %v83 = vrot.slane %v80, 4
    %v84 = vsel %vm57, 0.0, %v83
    %vm85 = vcmask 257024
    %v86 = vsel %vm85, %v76, 0.0
    %87 = vadd.xlane.f32.xlu0 %v86
    %v88 = vpop.xlane.xlu0 %87
    %v89 = vsel %vm85, %v82, 0.0
    %90 = vadd.xlane.f32.xlu0 %v89
    %v91 = vpop.xlane.xlu0 %90
    %v92 = vsel %vm85, %v80, 0.0
    %93 = vadd.xlane.f32.xlu0 %v92
    %v94 = vpop.xlane.xlu0 %93
    %v95 = vsel %vm85, %v84, 0.0
    %96 = vadd.xlane.f32.xlu0 %v95
    %v97 = vpop.xlane.xlu0 %96
    %v102 = vlaneseq
    %v103 = vand.u32 %v102, 127
    %v104 = vperm.slane %v88, %v103
    %v105 = vperm.slane %v91, %v103
    %v106 = vperm.slane %v94, %v103
    %v107 = vperm.slane %v97, %v103
    %vm108 = vcmask 1041409
    %v109 = vsel %vm108, %v105, %v104
    %vm110 = vcmask 1042434
    %v111 = vsel %vm110, %v106, %v109
    %vm112 = vcmask 1043459
    %v113 = vsel %vm112, %v107, %v111
    %vm115 = vcmask 27648
    %116 = vst.msk [vmem:[#allocation7] sm:$0xf] %vm115, %v113
    // Predicated region
    $region18: #{tpu_custom_call.1} parent=1 // pred_check
      _
    $region19: #{tpu_custom_call.1} parent=1 // pred_check_branch
      %118 = sbr.rel (0) target = $region21
    $region20: #{tpu_custom_call.1} parent=1 // pred_region
      %120 = vsyncadd [#allocation4], 0
      %s122 = sshll.u32 [#allocation7], 4
      %s123 = int_to_ptr.vmem [resolvable:$true] %s122
      %s124 = sshll.u32 %s2, 4
      %s125 = int_to_ptr.hbm [resolvable:$true] %s124
      %127 = dma.vmem_to_hbm [thread:$0]  %s123, 64, %s125, [#allocation4]
    $region21: #{tpu_custom_call.1} parent=1 // pred_fallthru
      _
    // Predicated region
    $region22: #{tpu_custom_call.1} parent=1 // pred_check
      _
    $region23: #{tpu_custom_call.1} parent=1 // pred_check_branch
      %129 = sbr.rel (0) target = $region25
    $region24: #{tpu_custom_call.1} parent=1 // pred_region
      %131 = dma.done [#allocation4], 64
    $region25: #{tpu_custom_call.1} parent=1 // pred_fallthru
      _
    %132 = vsyncpa [#allocation3], 1
    %133 = vsyncpa [#allocation6], 1
    %134 = vsyncpa [#allocation4], 1

</llo_original>
